<compile_context>
chip_gen: v6e
topology: v6e:2x2x1
jax: 0.10.0
libtpu: 0.0.40
codegen_flags: <defaults>
</compile_context>

<pallas_src>
import functools
import math

import jax
import jax.numpy as jnp
from jax.experimental import pallas as pl
from jax.experimental.pallas import tpu as pltpu

LN_EPS = 1e-5  # torch.nn.LayerNorm default


def _patch_expand_kernel(x_ref, w_ref, g_ref, b_ref, o_ref):
    # x_ref: (R = TH*W, C) bf16   w_ref: (C, 4C) bf16   g_ref/b_ref: (1, C) f32
    # o_ref: (TH, 2, W, 2C)  -- layout (bh, p1, w, (p2, c))
    R, C = x_ref.shape
    TH = o_ref.shape[0]
    W = o_ref.shape[2]

    x = x_ref[...]                                   # (R, C) bf16
    gamma = g_ref[...].astype(jnp.float32)           # (1, C) -- hoisted out of loops
    beta = b_ref[...].astype(jnp.float32)            # (1, C)
    inv_c = jnp.float32(1.0 / C)                     # replace per-chunk divides

    for p1 in range(2):
        # Half the expanded channels at a time: MXU N = 2C while the live f32
        # intermediate is only (R, 2C). bf16 inputs, f32 accumulation.
        y = jnp.dot(x, w_ref[:, 2 * p1 * C:2 * (p1 + 1) * C],
                    preferred_element_type=jnp.float32)          # (R, 2C) f32
        halves = []
        for p2 in range(2):
            chunk = y[:, p2 * C:(p2 + 1) * C]                    # (R, C)
            # Single-pass moments: var = E[x^2] - mean^2 (f32; clamp tiny
            # negative from cancellation).
            s1 = jnp.sum(chunk, axis=-1, keepdims=True)
            s2 = jnp.sum(chunk * chunk, axis=-1, keepdims=True)
            mean = s1 * inv_c
            var = jnp.maximum(s2 * inv_c - mean * mean, 0.0)
            normed = (chunk - mean) * jax.lax.rsqrt(var + LN_EPS)
            halves.append(normed * gamma + beta)                 # (R, C)
        # One lane-dense store per p1: full 2C-wide slab (no sub-128 lane
        # offsets even when C is not a multiple of 128).
        slab = jnp.concatenate(halves, axis=-1)                  # (R, 2C) f32
        o_ref[:, p1, :, :] = slab.reshape(TH, W, 2 * C).astype(o_ref.dtype)


def _row_align(W):
    # smallest th with (th * W) % 8 == 0 -> sublane-aligned input blocks
    return 8 // math.gcd(W, 8)


def _choose_row_tile(BH, W, target_rows, min_tiles):
    """Image rows (of W pixels each) per grid step.

    Keeps (TH*W) % 8 == 0 and, when the problem is big enough, caps TH so the
    grid has at least `min_tiles` steps (DMA/compute overlap; on v7x lets the
    "parallel" axis shard across both TensorCores).
    """
    m = _row_align(W)
    th = max(1, target_rows // max(W, 1))
    th = max(m, (th // m) * m)
    cap = ((BH // max(min_tiles, 1)) // m) * m
    if cap >= m:
        th = min(th, cap)
    if th >= BH or (th * W) % 8 != 0:
        return BH
    return th


def _vmem_capacity_bytes():
    try:
        cap = int(getattr(pltpu.get_tpu_info(), "vmem_capacity_bytes", 0))
        if cap > 0:
            return cap
    except Exception:
        pass
    return 128 << 20  # assume a 128 MiB part if the query is unavailable


@functools.partial(jax.jit, static_argnames=("H", "W", "out_dtype"))
def patch_expand(x, w_expand_t, ln_gamma, ln_beta, *, H, W, out_dtype=None):
    """x: (B, H*W, C); w_expand_t: (C, 4C) (= torch Linear weight^T); ln_*: (C,)."""
    B, L, C = x.shape
    assert L == H * W, "input feature has wrong size"
    assert w_expand_t.shape == (C, 4 * C)
    BH = B * H
    out_dtype = jnp.dtype(out_dtype) if out_dtype is not None else x.dtype

    # --- generation-aware budgets (v7x: 64 MiB VMEM / 2 TCs) -----------------
    vmem_cap = _vmem_capacity_bytes()
    small_vmem = vmem_cap <= (64 << 20)
    budget_cap = (36 << 20) if small_vmem else (96 << 20)
    target_rows = 512 if small_vmem else 1024
    min_tiles = 4 if small_vmem else 2

    # bf16 MXU feed; halves x/W HBM + VMEM bytes. Matmul accumulates in f32.
    x_mm = x.astype(jnp.bfloat16)
    w_mm = w_expand_t.astype(jnp.bfloat16)
    in_item = jnp.dtype(jnp.bfloat16).itemsize
    out_item = jnp.dtype(out_dtype).itemsize

    def vmem_needed(th):
        r = th * W
        blk_in = r * C * in_item
        blk_w = C * 4 * C * in_item
        blk_out = th * 2 * W * 2 * C * out_item
        interm = r * 2 * C * 4                      # f32 (R, 2C) slabs
        return 2 * (blk_in + blk_out + blk_w) + 3 * interm + (2 << 20)

    m = _row_align(W)
    TH = _choose_row_tile(BH, W, target_rows, min_tiles)
    # Shrink the tile (not the limit) if the block set doesn't fit the budget.
    while TH > m and vmem_needed(TH) > budget_cap:
        new_th = max(m, ((TH // 2) // m) * m)
        if new_th == TH:
            break
        TH = new_th
    need = vmem_needed(TH)
    if need <= budget_cap:
        vmem_limit = int(max(need, 16 << 20))
    else:  # can't shrink further; grant what's needed (within physical reason)
        vmem_limit = int(min(need, (vmem_cap * 3) // 4))

    R = TH * W                                    # matmul M per grid step
    n_tiles = pl.cdiv(BH, TH)

    x_flat = x_mm.reshape(BH * W, C)              # free view: batch folded into rows
    g2 = ln_gamma.reshape(1, C).astype(jnp.float32)
    b2 = ln_beta.reshape(1, C).astype(jnp.float32)

    y = pl.pallas_call(
        _patch_expand_kernel,
        out_shape=jax.ShapeDtypeStruct((BH, 2, W, 2 * C), out_dtype),
        grid_spec=pltpu.PrefetchScalarGridSpec(
            num_scalar_prefetch=0,
            grid=(n_tiles,),
            in_specs=[
                pl.BlockSpec((R, C), lambda i: (i, 0)),
                pl.BlockSpec((C, 4 * C), lambda i: (0, 0)),
                pl.BlockSpec((1, C), lambda i: (0, 0)),
                pl.BlockSpec((1, C), lambda i: (0, 0)),
            ],
            out_specs=pl.BlockSpec((TH, 2, W, 2 * C), lambda i: (i, 0, 0, 0)),
        ),
        compiler_params=pltpu.CompilerParams(
            dimension_semantics=("parallel",),
            vmem_limit_bytes=vmem_limit,
        ),
    )(x_flat, w_mm, g2, b2)

    # (BH, 2, W, 2C) row-major IS (B, 2H, 2W, C) row-major -> contiguous no-op view.
    return y.reshape(B, 4 * H * W, C)


def _reference(x, w_expand_t, ln_gamma, ln_beta, H, W):
    B, L, C = x.shape
    y = x @ w_expand_t                                       # (B, L, 4C) in f32
    y = y.reshape(B, H, W, 2, 2, C).transpose(0, 1, 3, 2, 4, 5).reshape(B, 4 * H * W, C)
    mean = y.mean(-1, keepdims=True)
    var = ((y - mean) ** 2).mean(-1, keepdims=True)
    return (y - mean) / jnp.sqrt(var + LN_EPS) * ln_gamma + ln_beta


if __name__ == "__main__":
    B, H, W, C = 2, 8, 8, 128       # dim = 128, input_resolution = (8, 8)
    key = jax.random.PRNGKey(0)
    kx, kw, kg, kb = jax.random.split(key, 4)

    x = jax.random.normal(kx, (B, H * W, C), dtype=jnp.float32)
    # torch Linear(dim, 4*dim, bias=False).weight has shape (4C, C); we pass its
    # transpose (C, 4C) so y = x @ W^T.
    w_expand_t = jax.random.normal(kw, (C, 4 * C), dtype=jnp.float32) * 0.02
    ln_gamma = 1.0 + 0.01 * jax.random.normal(kg, (C,), dtype=jnp.float32)
    ln_beta = 0.01 * jax.random.normal(kb, (C,), dtype=jnp.float32)

    out = patch_expand(x, w_expand_t, ln_gamma, ln_beta, H=H, W=W)
    out = jax.block_until_ready(out)

    ref = _reference(x, w_expand_t, ln_gamma, ln_beta, H, W)
    assert out.shape == (B, 4 * H * W, C), out.shape
    # Tolerance loosened vs pure-f32: MXU inputs are bf16 (f32 accumulation);
    # the post-matmul LayerNorm (f32) absorbs most of the rounding.
    max_err = float(jnp.max(jnp.abs(out - ref)))
    assert max_err < 5e-2, f"mismatch vs reference: max abs err {max_err}"

    print("KERNEL_OK")
</pallas_src>

<mosaic_0001>
module attributes {stable_mosaic.version = 11 : i64} {
  func.func @_patch_expand_kernel(%arg0: i32, %arg1: memref<64x128xbf16, #tpu.memory_space<vmem>>, %arg2: memref<128x512xbf16, #tpu.memory_space<vmem>>, %arg3: memref<1x128xf32, #tpu.memory_space<vmem>>, %arg4: memref<1x128xf32, #tpu.memory_space<vmem>>, %arg5: memref<8x2x8x256xf32, #tpu.memory_space<vmem>>) attributes {dimension_semantics = [#tpu.dimension_semantics<parallel>], iteration_bounds = array<i64: 2>, scalar_prefetch = 0 : i64, scratch_operands = 0 : i64, tpu.core_type = #tpu.core_type<tc>, window_params = [{transform_indices = @transform_0, window_bounds = array<i64: 64, 128>}, {pipeline_mode = #tpu.pipeline_mode<synchronous>, transform_indices = @transform_1, window_bounds = array<i64: 128, 512>}, {pipeline_mode = #tpu.pipeline_mode<synchronous>, transform_indices = @transform_2, window_bounds = array<i64: 1, 128>}, {pipeline_mode = #tpu.pipeline_mode<synchronous>, transform_indices = @transform_3, window_bounds = array<i64: 1, 128>}, {transform_indices = @transform_4, window_bounds = array<i64: 8, 2, 8, 256>}]} {
    %c0 = arith.constant 0 : index
    %c0_0 = arith.constant 0 : index
    %0 = vector.load %arg1[%c0, %c0_0] : memref<64x128xbf16, #tpu.memory_space<vmem>>, vector<64x128xbf16>
    %c0_1 = arith.constant 0 : index
    %c0_2 = arith.constant 0 : index
    %1 = vector.load %arg3[%c0_1, %c0_2] : memref<1x128xf32, #tpu.memory_space<vmem>>, vector<1x128xf32>
    %c0_3 = arith.constant 0 : index
    %c0_4 = arith.constant 0 : index
    %2 = vector.load %arg4[%c0_3, %c0_4] : memref<1x128xf32, #tpu.memory_space<vmem>>, vector<1x128xf32>
    %c0_5 = arith.constant 0 : index
    %c0_6 = arith.constant 0 : index
    %3 = vector.load %arg2[%c0_5, %c0_6] : memref<128x512xbf16, #tpu.memory_space<vmem>>, vector<128x256xbf16>
    %cst = arith.constant dense<0.000000e+00> : vector<64x256xf32>
    %4 = tpu.matmul %0, %3, %cst {dimension_numbers = #tpu.dot_dimension_numbers<[1], [0], [0], [1], [0, 0, 1, 1], [], []>} : vector<64x128xbf16>, vector<128x256xbf16>, vector<64x256xf32> -> vector<64x256xf32>
    %5 = vector.extract_strided_slice %4 {offsets = [0, 0], sizes = [64, 128], strides = [1, 1]} : vector<64x256xf32> to vector<64x128xf32>
    %cst_7 = arith.constant dense<0.000000e+00> : vector<64xf32>
    %6 = vector.multi_reduction <add>, %5, %cst_7 [1] : vector<64x128xf32> to vector<64xf32>
    %7 = vector.shape_cast %6 : vector<64xf32> to vector<64x1xf32>
    %8 = arith.mulf %5, %5 : vector<64x128xf32>
    %cst_8 = arith.constant dense<0.000000e+00> : vector<64xf32>
    %9 = vector.multi_reduction <add>, %8, %cst_8 [1] : vector<64x128xf32> to vector<64xf32>
    %10 = vector.shape_cast %9 : vector<64xf32> to vector<64x1xf32>
    %cst_9 = arith.constant 7.812500e-03 : f32
    %11 = vector.broadcast %cst_9 : f32 to vector<64x1xf32>
    %12 = arith.mulf %7, %11 : vector<64x1xf32>
    %cst_10 = arith.constant 7.812500e-03 : f32
    %13 = vector.broadcast %cst_10 : f32 to vector<64x1xf32>
    %14 = arith.mulf %10, %13 : vector<64x1xf32>
    %15 = arith.mulf %12, %12 : vector<64x1xf32>
    %16 = arith.subf %14, %15 : vector<64x1xf32>
    %cst_11 = arith.constant 0.000000e+00 : f32
    %17 = vector.broadcast %cst_11 : f32 to vector<64x1xf32>
    %18 = arith.maximumf %16, %17 : vector<64x1xf32>
    %19 = vector.broadcast %12 : vector<64x1xf32> to vector<64x128xf32>
    %20 = arith.subf %5, %19 : vector<64x128xf32>
    %cst_12 = arith.constant 9.99999974E-6 : f32
    %21 = vector.broadcast %cst_12 : f32 to vector<64x1xf32>
    %22 = arith.addf %18, %21 : vector<64x1xf32>
    %23 = math.rsqrt %22 : vector<64x1xf32>
    %24 = vector.broadcast %23 : vector<64x1xf32> to vector<64x128xf32>
    %25 = arith.mulf %20, %24 : vector<64x128xf32>
    %26 = vector.broadcast %1 : vector<1x128xf32> to vector<64x128xf32>
    %27 = arith.mulf %25, %26 : vector<64x128xf32>
    %28 = vector.broadcast %2 : vector<1x128xf32> to vector<64x128xf32>
    %29 = arith.addf %27, %28 : vector<64x128xf32>
    %30 = vector.extract_strided_slice %4 {offsets = [0, 128], sizes = [64, 128], strides = [1, 1]} : vector<64x256xf32> to vector<64x128xf32>
    %cst_13 = arith.constant dense<0.000000e+00> : vector<64xf32>
    %31 = vector.multi_reduction <add>, %30, %cst_13 [1] : vector<64x128xf32> to vector<64xf32>
    %32 = vector.shape_cast %31 : vector<64xf32> to vector<64x1xf32>
    %33 = arith.mulf %30, %30 : vector<64x128xf32>
    %cst_14 = arith.constant dense<0.000000e+00> : vector<64xf32>
    %34 = vector.multi_reduction <add>, %33, %cst_14 [1] : vector<64x128xf32> to vector<64xf32>
    %35 = vector.shape_cast %34 : vector<64xf32> to vector<64x1xf32>
    %cst_15 = arith.constant 7.812500e-03 : f32
    %36 = vector.broadcast %cst_15 : f32 to vector<64x1xf32>
    %37 = arith.mulf %32, %36 : vector<64x1xf32>
    %cst_16 = arith.constant 7.812500e-03 : f32
    %38 = vector.broadcast %cst_16 : f32 to vector<64x1xf32>
    %39 = arith.mulf %35, %38 : vector<64x1xf32>
    %40 = arith.mulf %37, %37 : vector<64x1xf32>
    %41 = arith.subf %39, %40 : vector<64x1xf32>
    %cst_17 = arith.constant 0.000000e+00 : f32
    %42 = vector.broadcast %cst_17 : f32 to vector<64x1xf32>
    %43 = arith.maximumf %41, %42 : vector<64x1xf32>
    %44 = vector.broadcast %37 : vector<64x1xf32> to vector<64x128xf32>
    %45 = arith.subf %30, %44 : vector<64x128xf32>
    %cst_18 = arith.constant 9.99999974E-6 : f32
    %46 = vector.broadcast %cst_18 : f32 to vector<64x1xf32>
    %47 = arith.addf %43, %46 : vector<64x1xf32>
    %48 = math.rsqrt %47 : vector<64x1xf32>
    %49 = vector.broadcast %48 : vector<64x1xf32> to vector<64x128xf32>
    %50 = arith.mulf %45, %49 : vector<64x128xf32>
    %51 = vector.broadcast %1 : vector<1x128xf32> to vector<64x128xf32>
    %52 = arith.mulf %50, %51 : vector<64x128xf32>
    %53 = vector.broadcast %2 : vector<1x128xf32> to vector<64x128xf32>
    %54 = arith.addf %52, %53 : vector<64x128xf32>
    %55 = tpu.concatenate %29, %54 in 1 : vector<64x128xf32>, vector<64x128xf32> -> vector<64x256xf32>
    %56 = vector.shape_cast %55 : vector<64x256xf32> to vector<8x8x256xf32>
    %c0_19 = arith.constant 0 : index
    %c0_20 = arith.constant 0 : index
    %c0_21 = arith.constant 0 : index
    %c0_22 = arith.constant 0 : index
    %57 = vector.load %arg5[%c0_19, %c0_20, %c0_21, %c0_22] : memref<8x2x8x256xf32, #tpu.memory_space<vmem>>, vector<8x1x8x256xf32>
    %58 = vector.shape_cast %57 : vector<8x1x8x256xf32> to vector<8x8x256xf32>
    %59 = vector.shape_cast %56 : vector<8x8x256xf32> to vector<8x1x8x256xf32>
    tpu.vector_store %arg5[%c0_19, %c0_20, %c0_21, %c0_22], %59 {strides = array<i32>} : memref<8x2x8x256xf32, #tpu.memory_space<vmem>>, vector<8x1x8x256xf32>,
    %c0_23 = arith.constant 0 : index
    %c256 = arith.constant 256 : index
    %60 = vector.load %arg2[%c0_23, %c256] : memref<128x512xbf16, #tpu.memory_space<vmem>>, vector<128x256xbf16>
    %cst_24 = arith.constant dense<0.000000e+00> : vector<64x256xf32>
    %61 = tpu.matmul %0, %60, %cst_24 {dimension_numbers = #tpu.dot_dimension_numbers<[1], [0], [0], [1], [0, 0, 1, 1], [], []>} : vector<64x128xbf16>, vector<128x256xbf16>, vector<64x256xf32> -> vector<64x256xf32>
    %62 = vector.extract_strided_slice %61 {offsets = [0, 0], sizes = [64, 128], strides = [1, 1]} : vector<64x256xf32> to vector<64x128xf32>
    %cst_25 = arith.constant dense<0.000000e+00> : vector<64xf32>
    %63 = vector.multi_reduction <add>, %62, %cst_25 [1] : vector<64x128xf32> to vector<64xf32>
    %64 = vector.shape_cast %63 : vector<64xf32> to vector<64x1xf32>
    %65 = arith.mulf %62, %62 : vector<64x128xf32>
    %cst_26 = arith.constant dense<0.000000e+00> : vector<64xf32>
    %66 = vector.multi_reduction <add>, %65, %cst_26 [1] : vector<64x128xf32> to vector<64xf32>
    %67 = vector.shape_cast %66 : vector<64xf32> to vector<64x1xf32>
    %cst_27 = arith.constant 7.812500e-03 : f32
    %68 = vector.broadcast %cst_27 : f32 to vector<64x1xf32>
    %69 = arith.mulf %64, %68 : vector<64x1xf32>
    %cst_28 = arith.constant 7.812500e-03 : f32
    %70 = vector.broadcast %cst_28 : f32 to vector<64x1xf32>
    %71 = arith.mulf %67, %70 : vector<64x1xf32>
    %72 = arith.mulf %69, %69 : vector<64x1xf32>
    %73 = arith.subf %71, %72 : vector<64x1xf32>
    %cst_29 = arith.constant 0.000000e+00 : f32
    %74 = vector.broadcast %cst_29 : f32 to vector<64x1xf32>
    %75 = arith.maximumf %73, %74 : vector<64x1xf32>
    %76 = vector.broadcast %69 : vector<64x1xf32> to vector<64x128xf32>
    %77 = arith.subf %62, %76 : vector<64x128xf32>
    %cst_30 = arith.constant 9.99999974E-6 : f32
    %78 = vector.broadcast %cst_30 : f32 to vector<64x1xf32>
    %79 = arith.addf %75, %78 : vector<64x1xf32>
    %80 = math.rsqrt %79 : vector<64x1xf32>
    %81 = vector.broadcast %80 : vector<64x1xf32> to vector<64x128xf32>
    %82 = arith.mulf %77, %81 : vector<64x128xf32>
    %83 = vector.broadcast %1 : vector<1x128xf32> to vector<64x128xf32>
    %84 = arith.mulf %82, %83 : vector<64x128xf32>
    %85 = vector.broadcast %2 : vector<1x128xf32> to vector<64x128xf32>
    %86 = arith.addf %84, %85 : vector<64x128xf32>
    %87 = vector.extract_strided_slice %61 {offsets = [0, 128], sizes = [64, 128], strides = [1, 1]} : vector<64x256xf32> to vector<64x128xf32>
    %cst_31 = arith.constant dense<0.000000e+00> : vector<64xf32>
    %88 = vector.multi_reduction <add>, %87, %cst_31 [1] : vector<64x128xf32> to vector<64xf32>
    %89 = vector.shape_cast %88 : vector<64xf32> to vector<64x1xf32>
    %90 = arith.mulf %87, %87 : vector<64x128xf32>
    %cst_32 = arith.constant dense<0.000000e+00> : vector<64xf32>
    %91 = vector.multi_reduction <add>, %90, %cst_32 [1] : vector<64x128xf32> to vector<64xf32>
    %92 = vector.shape_cast %91 : vector<64xf32> to vector<64x1xf32>
    %cst_33 = arith.constant 7.812500e-03 : f32
    %93 = vector.broadcast %cst_33 : f32 to vector<64x1xf32>
    %94 = arith.mulf %89, %93 : vector<64x1xf32>
    %cst_34 = arith.constant 7.812500e-03 : f32
    %95 = vector.broadcast %cst_34 : f32 to vector<64x1xf32>
    %96 = arith.mulf %92, %95 : vector<64x1xf32>
    %97 = arith.mulf %94, %94 : vector<64x1xf32>
    %98 = arith.subf %96, %97 : vector<64x1xf32>
    %cst_35 = arith.constant 0.000000e+00 : f32
    %99 = vector.broadcast %cst_35 : f32 to vector<64x1xf32>
    %100 = arith.maximumf %98, %99 : vector<64x1xf32>
    %101 = vector.broadcast %94 : vector<64x1xf32> to vector<64x128xf32>
    %102 = arith.subf %87, %101 : vector<64x128xf32>
    %cst_36 = arith.constant 9.99999974E-6 : f32
    %103 = vector.broadcast %cst_36 : f32 to vector<64x1xf32>
    %104 = arith.addf %100, %103 : vector<64x1xf32>
    %105 = math.rsqrt %104 : vector<64x1xf32>
    %106 = vector.broadcast %105 : vector<64x1xf32> to vector<64x128xf32>
    %107 = arith.mulf %102, %106 : vector<64x128xf32>
    %108 = vector.broadcast %1 : vector<1x128xf32> to vector<64x128xf32>
    %109 = arith.mulf %107, %108 : vector<64x128xf32>
    %110 = vector.broadcast %2 : vector<1x128xf32> to vector<64x128xf32>
    %111 = arith.addf %109, %110 : vector<64x128xf32>
    %112 = tpu.concatenate %86, %111 in 1 : vector<64x128xf32>, vector<64x128xf32> -> vector<64x256xf32>
    %113 = vector.shape_cast %112 : vector<64x256xf32> to vector<8x8x256xf32>
    %c0_37 = arith.constant 0 : index
    %c1 = arith.constant 1 : index
    %c0_38 = arith.constant 0 : index
    %c0_39 = arith.constant 0 : index
    %114 = vector.load %arg5[%c0_37, %c1, %c0_38, %c0_39] : memref<8x2x8x256xf32, #tpu.memory_space<vmem>>, vector<8x1x8x256xf32>
    %115 = vector.shape_cast %114 : vector<8x1x8x256xf32> to vector<8x8x256xf32>
    %116 = vector.shape_cast %113 : vector<8x8x256xf32> to vector<8x1x8x256xf32>
    tpu.vector_store %arg5[%c0_37, %c1, %c0_38, %c0_39], %116 {strides = array<i32>} : memref<8x2x8x256xf32, #tpu.memory_space<vmem>>, vector<8x1x8x256xf32>,
    return
  }
  func.func @transform_0(%arg0: i32) -> (i32, i32) {
    %c0_i32 = arith.constant 0 : i32
    %c0_i32_0 = arith.constant 0 : i32
    return %arg0, %c0_i32 : i32, i32
  }
  func.func @transform_1(%arg0: i32) -> (i32, i32) {
    %c0_i32 = arith.constant 0 : i32
    %c0_i32_0 = arith.constant 0 : i32
    %c0_i32_1 = arith.constant 0 : i32
    return %c0_i32, %c0_i32_0 : i32, i32
  }
  func.func @transform_2(%arg0: i32) -> (i32, i32) {
    %c0_i32 = arith.constant 0 : i32
    %c0_i32_0 = arith.constant 0 : i32
    %c0_i32_1 = arith.constant 0 : i32
    return %c0_i32, %c0_i32_0 : i32, i32
  }
  func.func @transform_3(%arg0: i32) -> (i32, i32) {
    %c0_i32 = arith.constant 0 : i32
    %c0_i32_0 = arith.constant 0 : i32
    %c0_i32_1 = arith.constant 0 : i32
    return %c0_i32, %c0_i32_0 : i32, i32
  }
  func.func @transform_4(%arg0: i32) -> (i32, i32, i32, i32) {
    %c0_i32 = arith.constant 0 : i32
    %c0_i32_0 = arith.constant 0 : i32
    %c0_i32_1 = arith.constant 0 : i32
    %c0_i32_2 = arith.constant 0 : i32
    return %arg0, %c0_i32, %c0_i32_0, %c0_i32_1 : i32, i32, i32, i32
  }
}

</mosaic_0001>

<llo_original>
// kernel: patch_expand.1
$region0: #{patch_expand.1}
  #allocation0 [shape = 'u32[]', space=smem, size = 0x4, offset = 0x4, fixed_abs, tag = 'smem constant byte address 0x4 - core index']
  #allocation1 [shape = 'u32[144,128]{1,0:T(1,128)}', space=vmem, size = 0x12000, scoped, tag = 'internal scratch']
  %s0 = inlined_call_operand.vmem [shape: bf16[128,128], index: 0, kind: input, shape index: {}]
  %s1 = inlined_call_operand.vmem [shape: bf16[128,512], index: 1, kind: input, shape index: {}]
  %s2 = inlined_call_operand.vmem [shape: f32[1,128], index: 2, kind: input, shape index: {}]
  %s3 = inlined_call_operand.vmem [shape: f32[1,128], index: 3, kind: input, shape index: {}]
  %s4 = inlined_call_operand.vmem [shape: f32[16,2,8,256], index: 4, kind: output, shape index: {}]
  %s5 = sld [smem:[#allocation0]]
  $region49: #{patch_expand.1} parent=0
    _
  %s7 = ssub.s32 1, %s5
  %s8 = scalar_select 0, %s7, %s5
  loop: start=0, step=1, limit=4
  $region2: #{patch_expand.1} parent=0 // loop_pre_header
    _
  $region3: #{patch_expand.1} parent=0 // loop_header
    %s10 = sphi 0, %s14
    %p11 = scmp.ge.s32.totalorder %s10, 4
    %s20 = sphi 0, %s22
    %s23 = sphi 0, %s20
    %s24 = sphi 0, %s23
    %s40 = sphi 0, %s24
    %s44 = sphi 0, %s44
    %s46 = sphi 0, %s44
    %s47 = sphi 0, %s46
    %s61 = sphi 0, %s47
    %s65 = sphi 0, %s65
    %s67 = sphi 0, %s65
    %s68 = sphi 0, %s67
    %s82 = sphi 0, %s68
    %s86 = sphi 0, %s86
    %s88 = sphi 0, %s86
    %s89 = sphi 0, %s88
    %s103 = sphi 0, %s89
    %s109 = sphi 0, %s111
    %s112 = sphi 0, %s109
    %s113 = sphi 0, %s112
    %s129 = sphi 0, %s113
  $region4: #{patch_expand.1} parent=0 // loop_header_branch
    %13 = sbr.rel (%p11) target = $region8
  $region5: #{patch_expand.1} parent=0 // loop_body
    %s15 = ssub.s32 %s10, 1
    %s16 = ssub.s32 %s10, 2
    %s17 = sadd.s32 %s10, 1
    %s18 = ssub.s32 %s10, %s17
    %p19 = scmp.eq.s32.totalorder %s18, 0
    %s21 = sadd.s32 %s20, 1
    %s22 = scalar_select %p19, %s20, %s21
    %p25 = pneg %p19
    %p26 = scmp.eq.s32.totalorder %s10, 1
    %p27 = por %p25, %p26
    %p28 = scmp.ne.s32.totalorder %s20, %s23
    %p29 = scmp.eq.s32.totalorder %s10, 0
    %p30 = por %p28, %p29
    %p31 = scmp.ne.s32.totalorder %s20, %s23
    %p32 = scmp.eq.s32.totalorder %s15, 1
    %p33 = por %p31, %p32
    %p34 = scmp.ne.s32.totalorder %s23, %s24
    %p35 = scmp.eq.s32.totalorder %s15, 0
    %p36 = por %p34, %p35
    %p37 = scmp.ne.s32.totalorder %s23, %s24
    %p38 = scmp.eq.s32.totalorder %s16, 1
    %p39 = por %p37, %p38
    %p41 = scmp.ne.s32.totalorder %s24, %s40
    %p42 = scmp.eq.s32.totalorder %s16, 0
    %p43 = por %p41, %p42
    %s45 = sadd.s32 %s44, 1
    %p48 = scmp.eq.s32.totalorder %s10, 1
    %p49 = scmp.ne.s32.totalorder %s44, %s46
    %p50 = scmp.eq.s32.totalorder %s10, 0
    %p51 = por %p49, %p50
    %p52 = scmp.ne.s32.totalorder %s44, %s46
    %p53 = scmp.eq.s32.totalorder %s15, 1
    %p54 = por %p52, %p53
    %p55 = scmp.ne.s32.totalorder %s46, %s47
    %p56 = scmp.eq.s32.totalorder %s15, 0
    %p57 = por %p55, %p56
    %p58 = scmp.ne.s32.totalorder %s46, %s47
    %p59 = scmp.eq.s32.totalorder %s16, 1
    %p60 = por %p58, %p59
    %p62 = scmp.ne.s32.totalorder %s47, %s61
    %p63 = scmp.eq.s32.totalorder %s16, 0
    %p64 = por %p62, %p63
    %s66 = sadd.s32 %s65, 1
    %p69 = scmp.eq.s32.totalorder %s10, 1
    %p70 = scmp.ne.s32.totalorder %s65, %s67
    %p71 = scmp.eq.s32.totalorder %s10, 0
    %p72 = por %p70, %p71
    %p73 = scmp.ne.s32.totalorder %s65, %s67
    %p74 = scmp.eq.s32.totalorder %s15, 1
    %p75 = por %p73, %p74
    %p76 = scmp.ne.s32.totalorder %s67, %s68
    %p77 = scmp.eq.s32.totalorder %s15, 0
    %p78 = por %p76, %p77
    %p79 = scmp.ne.s32.totalorder %s67, %s68
    %p80 = scmp.eq.s32.totalorder %s16, 1
    %p81 = por %p79, %p80
    %p83 = scmp.ne.s32.totalorder %s68, %s82
    %p84 = scmp.eq.s32.totalorder %s16, 0
    %p85 = por %p83, %p84
    %s87 = sadd.s32 %s86, 1
    %p90 = scmp.eq.s32.totalorder %s10, 1
    %p91 = scmp.ne.s32.totalorder %s86, %s88
    %p92 = scmp.eq.s32.totalorder %s10, 0
    %p93 = por %p91, %p92
    %p94 = scmp.ne.s32.totalorder %s86, %s88
    %p95 = scmp.eq.s32.totalorder %s15, 1
    %p96 = por %p94, %p95
    %p97 = scmp.ne.s32.totalorder %s88, %s89
    %p98 = scmp.eq.s32.totalorder %s15, 0
    %p99 = por %p97, %p98
    %p100 = scmp.ne.s32.totalorder %s88, %s89
    %p101 = scmp.eq.s32.totalorder %s16, 1
    %p102 = por %p100, %p101
    %p104 = scmp.ne.s32.totalorder %s89, %s103
    %p105 = scmp.eq.s32.totalorder %s16, 0
    %p106 = por %p104, %p105
    %s107 = ssub.s32 %s10, %s17
    %p108 = scmp.eq.s32.totalorder %s107, 0
    %s110 = sadd.s32 %s109, 1
    %s111 = scalar_select %p108, %s109, %s110
    %p114 = pneg %p108
    %p115 = scmp.eq.s32.totalorder %s10, 1
    %p116 = por %p114, %p115
    %p117 = scmp.ne.s32.totalorder %s109, %s112
    %p118 = scmp.eq.s32.totalorder %s10, 0
    %p119 = por %p117, %p118
    %p120 = scmp.ne.s32.totalorder %s109, %s112
    %p121 = scmp.eq.s32.totalorder %s15, 1
    %p122 = por %p120, %p121
    %p123 = scmp.ne.s32.totalorder %s112, %s113
    %p124 = scmp.eq.s32.totalorder %s15, 0
    %p125 = por %p123, %p124
    %p126 = scmp.ne.s32.totalorder %s112, %s113
    %p127 = scmp.eq.s32.totalorder %s16, 1
    %p128 = por %p126, %p127
    %p130 = scmp.ne.s32.totalorder %s113, %s129
    %p131 = scmp.eq.s32.totalorder %s16, 0
    %p132 = por %p130, %p131
    %p133 = scmp.le.s32.totalorder 1, %s10
    %p134 = scmp.lt.s32.totalorder %s10, 3
    %p135 = pnand %p133, %p134
    %p136 = pneg %p135
    // Predicated region
    $region9: #{patch_expand.1} parent=5 // pred_check
      _
    $region10: #{patch_expand.1} parent=5 // pred_check_branch
      %138 = sbr.rel (%p135) target = $region12
    $region11: #{patch_expand.1} parent=5 // pred_region
      %s139 = ssub.s32 %s10, 1
      // Predicated region
      $region13: #{patch_expand.1} parent=11 // pred_check
        %p140 = pneg %p57
      $region14: #{patch_expand.1} parent=11 // pred_check_branch
        %142 = sbr.rel (%p140) target = $region16
      $region15: #{patch_expand.1} parent=11 // pred_region
        _
      $region16: #{patch_expand.1} parent=11 // pred_fallthru
        _
      // Predicated region
      $region17: #{patch_expand.1} parent=11 // pred_check
        %p143 = pneg %p78
      $region18: #{patch_expand.1} parent=11 // pred_check_branch
        %145 = sbr.rel (%p143) target = $region20
      $region19: #{patch_expand.1} parent=11 // pred_region
        _
      $region20: #{patch_expand.1} parent=11 // pred_fallthru
        _
      // Predicated region
      $region21: #{patch_expand.1} parent=11 // pred_check
        %p146 = pneg %p99
      $region22: #{patch_expand.1} parent=11 // pred_check_branch
        %148 = sbr.rel (%p146) target = $region24
      $region23: #{patch_expand.1} parent=11 // pred_region
        _
      $region24: #{patch_expand.1} parent=11 // pred_fallthru
        _
    $region12: #{patch_expand.1} parent=5 // pred_fallthru
      _
    %p149 = scmp.lt.s32.totalorder %s10, 2
    // Predicated region
    $region25: #{patch_expand.1} parent=5 // pred_check
      %p150 = pneg %p149
    $region26: #{patch_expand.1} parent=5 // pred_check_branch
      %152 = sbr.rel (%p150) target = $region28
    $region27: #{patch_expand.1} parent=5 // pred_region
      // Predicated region
      $region29: #{patch_expand.1} parent=27 // pred_check
        %p153 = pneg %p30
      $region30: #{patch_expand.1} parent=27 // pred_check_branch
        %155 = sbr.rel (%p153) target = $region32
      $region31: #{patch_expand.1} parent=27 // pred_region
        %s156 = smul.u32 8, %s10
        %p157 = scmp.lt.s32.totalorder %s156, 15
        %s158 = scalar_select %p157, %s156, 15
        %s159 = smul.addr %s158, 4
        %s160 = scalar_lea.vmem %s0, %s159
        %s161 = smul.u32 8, %s10
      $region32: #{patch_expand.1} parent=27 // pred_fallthru
        _
    $region28: #{patch_expand.1} parent=5 // pred_fallthru
      _
    %p162 = scmp.le.s32.totalorder 1, %s10
    %p163 = scmp.lt.s32.totalorder %s10, 3
    %p164 = pnand %p162, %p163
    %p165 = pneg %p164
    // Predicated region
    $region33: #{patch_expand.1} parent=5 // pred_check
      _
    $region34: #{patch_expand.1} parent=5 // pred_check_branch
      %167 = sbr.rel (%p164) target = $region36
    $region35: #{patch_expand.1} parent=5 // pred_region
      %s168 = ssub.s32 %s10, 1
      %s169 = smul.u32 8, %s15
      %p170 = scmp.lt.s32.totalorder %s169, 15
      %s171 = scalar_select %p170, %s169, 15
      %s172 = smul.addr %s171, 4
      %s173 = scalar_lea.vmem %s0, %s172
      %p174 = pneg %p36
      %p175 = pneg %p33
      %p176 = pneg %p57
      %p177 = pneg %p54
      %p178 = pneg %p78
      %p179 = pneg %p75
      %p180 = pneg %p99
      %p181 = pneg %p96
      %p182 = pneg %p125
      %p183 = pneg %p122
      %s184 = smul.u32 8, %s15
      %p185 = scmp.lt.s32.totalorder %s184, 15
      %s186 = scalar_select %p185, %s184, 15
      %s187 = smul.addr %s186, 4
      %s188 = smul.addr %s187, 8
      %s189 = scalar_lea.vmem %s4, %s188
      %s190 = smul.u32 8, %s15
      %p191 = scmp.lt.s32.totalorder %s190, 15
      %s192 = scalar_select %p191, %s190, 15
      %s193 = smul.addr %s192, 4
      %s194 = scalar_lea.vmem %s0, %s193
      %s195 = smul.u32 8, %s15
      %s196 = smul.u32 8, %s15
      %p197 = scmp.lt.s32.totalorder %s196, 15
      %s198 = scalar_select %p197, %s196, 15
      %s199 = smul.addr %s198, 4
      %s200 = smul.addr %s199, 8
      %s201 = scalar_lea.vmem %s4, %s200
      %s202 = smul.u32 8, %s15
      %v204 = vld [vmem:[%s194] sm:$0xf]
      %v205 = vld [vmem:[%s194 + $0x4] sm:$0xf]
      %v206 = vld [vmem:[%s194 + $0x8] sm:$0xf]
      %v207 = vld [vmem:[%s194 + $0xc] sm:$0xf]
      %v208 = vld [vmem:[%s194 + $0x10] sm:$0xf]
      %v209 = vld [vmem:[%s194 + $0x14] sm:$0xf]
      %v210 = vld [vmem:[%s194 + $0x18] sm:$0xf]
      %v211 = vld [vmem:[%s194 + $0x1c] sm:$0xf]
      %v212 = vld [vmem:[%s2] sm:$0x1]
      %v213 = vld [vmem:[%s3] sm:$0x1]
      %v214 = vld [vmem:[%s1] sm:$0xff]
      %v215 = vld [vmem:[%s1 + $0x10] sm:$0xff]
      %v216 = vld [vmem:[%s1 + $0x20] sm:$0xff]
      %v217 = vld [vmem:[%s1 + $0x30] sm:$0xff]
      %v218 = vld [vmem:[%s1 + $0x40] sm:$0xff]
      %v219 = vld [vmem:[%s1 + $0x50] sm:$0xff]
      %v220 = vld [vmem:[%s1 + $0x60] sm:$0xff]
      %v221 = vld [vmem:[%s1 + $0x70] sm:$0xff]
      %v222 = vld [vmem:[%s1 + $0x80] sm:$0xff]
      %v223 = vld [vmem:[%s1 + $0x90] sm:$0xff]
      %v224 = vld [vmem:[%s1 + $0xa0] sm:$0xff]
      %v225 = vld [vmem:[%s1 + $0xb0] sm:$0xff]
      %v226 = vld [vmem:[%s1 + $0xc0] sm:$0xff]
      %v227 = vld [vmem:[%s1 + $0xd0] sm:$0xff]
      %v228 = vld [vmem:[%s1 + $0xe0] sm:$0xff]
      %v229 = vld [vmem:[%s1 + $0xf0] sm:$0xff]
      %v238 = vunpack.c.l.b16 %v204
      %v239 = vunpack.c.l.b16 %v205
      %v240 = vunpack.c.l.b16 %v206
      %v241 = vunpack.c.l.b16 %v207
      %v242 = vunpack.c.l.b16 %v208
      %v243 = vunpack.c.l.b16 %v209
      %v244 = vunpack.c.l.b16 %v210
      %v245 = vunpack.c.l.b16 %v211
      %v246 = vpack.c.b16 %v239, %v238
      %v247 = vpack.c.b16 %v241, %v240
      %v248 = vpack.c.b16 %v243, %v242
      %v249 = vpack.c.b16 %v245, %v244
      %v270 = vunpack.c.l.b16 %v214
      %v271 = vunpack.c.h.b16 %v214
      %v272 = vunpack.c.l.b16 %v215
      %v273 = vunpack.c.h.b16 %v215
      %v274 = vunpack.c.l.b16 %v216
      %v275 = vunpack.c.h.b16 %v216
      %v276 = vunpack.c.l.b16 %v217
      %v277 = vunpack.c.h.b16 %v217
      %v278 = vunpack.c.l.b16 %v218
      %v279 = vunpack.c.h.b16 %v218
      %v280 = vunpack.c.l.b16 %v219
      %v281 = vunpack.c.h.b16 %v219
      %v282 = vunpack.c.l.b16 %v220
      %v283 = vunpack.c.h.b16 %v220
      %v284 = vunpack.c.l.b16 %v221
      %v285 = vunpack.c.h.b16 %v221
      %v286 = vunpack.c.l.b16 %v222
      %v287 = vunpack.c.h.b16 %v222
      %v288 = vunpack.c.l.b16 %v223
      %v289 = vunpack.c.h.b16 %v223
      %v290 = vunpack.c.l.b16 %v224
      %v291 = vunpack.c.h.b16 %v224
      %v292 = vunpack.c.l.b16 %v225
      %v293 = vunpack.c.h.b16 %v225
      %v294 = vunpack.c.l.b16 %v226
      %v295 = vunpack.c.h.b16 %v226
      %v296 = vunpack.c.l.b16 %v227
      %v297 = vunpack.c.h.b16 %v227
      %v298 = vunpack.c.l.b16 %v228
      %v299 = vunpack.c.h.b16 %v228
      %v300 = vunpack.c.l.b16 %v229
      %v301 = vunpack.c.h.b16 %v229
      %v302 = vpack.c.b16 %v272, %v270
      %v303 = vpack.c.b16 %v273, %v271
      %v304 = vpack.c.b16 %v276, %v274
      %v305 = vpack.c.b16 %v277, %v275
      %v306 = vpack.c.b16 %v280, %v278
      %v307 = vpack.c.b16 %v281, %v279
      %v308 = vpack.c.b16 %v284, %v282
      %v309 = vpack.c.b16 %v285, %v283
      %v310 = vpack.c.b16 %v288, %v286
      %v311 = vpack.c.b16 %v289, %v287
      %v312 = vpack.c.b16 %v292, %v290
      %v313 = vpack.c.b16 %v293, %v291
      %v314 = vpack.c.b16 %v296, %v294
      %v315 = vpack.c.b16 %v297, %v295
      %v316 = vpack.c.b16 %v300, %v298
      %v317 = vpack.c.b16 %v301, %v299
      %334 = vmatprep.subr.bf16.mxu0 %v317
      %335 = vmatpush1.bf16.msra.mxu0 %v316
      %336 = vmatprep.subr.bf16.mxu0 %v315
      %337 = vmatpush1.bf16.msra.mxu0 %v314
      %338 = vmatprep.subr.bf16.mxu0 %v313
      %339 = vmatpush1.bf16.msra.mxu0 %v312
      %340 = vmatprep.subr.bf16.mxu0 %v311
      %341 = vmatpush1.bf16.msra.mxu0 %v310
      %342 = vmatprep.subr.bf16.mxu0 %v309
      %343 = vmatpush1.bf16.msra.mxu0 %v308
      %344 = vmatprep.subr.bf16.mxu0 %v307
      %345 = vmatpush1.bf16.msra.mxu0 %v306
      %346 = vmatprep.subr.bf16.mxu0 %v305
      %347 = vmatpush1.bf16.msra.mxu0 %v304
      %348 = vmatprep.subr.bf16.mxu0 %v303
      %349 = vmatpush1.bf16.msra.mxu0 %v302
      %350 = vmatprep.subr.bf16.mxu0 0
      %351 = vmatpush2.bf16.msra.mxu0 0
      %352 = vmatprep.subr.bf16.mxu0 0
      %353 = vmatpush2.bf16.msra.mxu0 0
      %354 = vmatprep.subr.bf16.mxu0 0
      %355 = vmatpush2.bf16.msra.mxu0 0
      %356 = vmatprep.subr.bf16.mxu0 0
      %357 = vmatpush2.bf16.msra.mxu0 0
      %358 = vmatprep.subr.bf16.mxu0 0
      %359 = vmatpush2.bf16.msra.mxu0 0
      %360 = vmatprep.subr.bf16.mxu0 0
      %361 = vmatpush2.bf16.msra.mxu0 0
      %362 = vmatprep.subr.bf16.mxu0 0
      %363 = vmatpush2.bf16.msra.mxu0 0
      %364 = vmatprep.subr.bf16.mxu0 0
      %365 = vmatpush2.bf16.msra.mxu0 0
      %366 = vmatprep.mubr.bf16.mxu0 0
      %367 = vmatmul.mubr.bf16.gmra.mxu0 %v246
      %v368 = vpop.f32.mrf.mxu0
      %v369 = vadd.f32 0.0, %v368
      %v370 = vpop.f32.mrf.mxu0
      %v371 = vadd.f32 0.0, %v370
      %v372 = vpop.f32.mrf.mxu0
      %v373 = vadd.f32 0.0, %v372
      %v374 = vpop.f32.mrf.mxu0
      %v375 = vadd.f32 0.0, %v374
      %376 = vmatprep.mubr.bf16.mxu0 0
      %377 = vmatmul.mubr.bf16.gmra.mxu0 %v247
      %v378 = vpop.f32.mrf.mxu0
      %v379 = vadd.f32 0.0, %v378
      %v380 = vpop.f32.mrf.mxu0
      %v381 = vadd.f32 0.0, %v380
      %v382 = vpop.f32.mrf.mxu0
      %v383 = vadd.f32 0.0, %v382
      %v384 = vpop.f32.mrf.mxu0
      %v385 = vadd.f32 0.0, %v384
      %386 = vmatprep.mubr.bf16.mxu0 0
      %387 = vmatmul.mubr.bf16.gmra.mxu0 %v248
      %v388 = vpop.f32.mrf.mxu0
      %v389 = vadd.f32 0.0, %v388
      %v390 = vpop.f32.mrf.mxu0
      %v391 = vadd.f32 0.0, %v390
      %v392 = vpop.f32.mrf.mxu0
      %v393 = vadd.f32 0.0, %v392
      %v394 = vpop.f32.mrf.mxu0
      %v395 = vadd.f32 0.0, %v394
      %396 = vmatprep.mubr.bf16.mxu0 0
      %397 = vmatmul.mubr.bf16.gmra.mxu0 %v249
      %v398 = vpop.f32.mrf.mxu0
      %v399 = vadd.f32 0.0, %v398
      %v400 = vpop.f32.mrf.mxu0
      %v401 = vadd.f32 0.0, %v400
      %v402 = vpop.f32.mrf.mxu0
      %v403 = vadd.f32 0.0, %v402
      %v404 = vpop.f32.mrf.mxu0
      %v405 = vadd.f32 0.0, %v404
      %406 = vdwg.mxu0
      %407 = vadd.xlane.f32.xlu0 %v369
      %v408 = vpop.xlane.xlu0 %407
      %409 = vadd.xlane.f32.xlu0 %v373
      %v410 = vpop.xlane.xlu0 %409
      %411 = vadd.xlane.f32.xlu0 %v379
      %v412 = vpop.xlane.xlu0 %411
      %413 = vadd.xlane.f32.xlu0 %v383
      %v414 = vpop.xlane.xlu0 %413
      %415 = vadd.xlane.f32.xlu0 %v389
      %v416 = vpop.xlane.xlu0 %415
      %417 = vadd.xlane.f32.xlu0 %v393
      %v418 = vpop.xlane.xlu0 %417
      %419 = vadd.xlane.f32.xlu0 %v399
      %v420 = vpop.xlane.xlu0 %419
      %421 = vadd.xlane.f32.xlu0 %v403
      %v422 = vpop.xlane.xlu0 %421
      %v423 = vmul.f32 %v369, %v369
      %v424 = vmul.f32 %v373, %v373
      %v425 = vmul.f32 %v379, %v379
      %v426 = vmul.f32 %v383, %v383
      %v427 = vmul.f32 %v389, %v389
      %v428 = vmul.f32 %v393, %v393
      %v429 = vmul.f32 %v399, %v399
      %v430 = vmul.f32 %v403, %v403
      %431 = vadd.xlane.f32.xlu0 %v423
      %v432 = vpop.xlane.xlu0 %431
      %433 = vadd.xlane.f32.xlu0 %v424
      %v434 = vpop.xlane.xlu0 %433
      %435 = vadd.xlane.f32.xlu0 %v425
      %v436 = vpop.xlane.xlu0 %435
      %437 = vadd.xlane.f32.xlu0 %v426
      %v438 = vpop.xlane.xlu0 %437
      %439 = vadd.xlane.f32.xlu0 %v427
      %v440 = vpop.xlane.xlu0 %439
      %441 = vadd.xlane.f32.xlu0 %v428
      %v442 = vpop.xlane.xlu0 %441
      %443 = vadd.xlane.f32.xlu0 %v429
      %v444 = vpop.xlane.xlu0 %443
      %445 = vadd.xlane.f32.xlu0 %v430
      %v446 = vpop.xlane.xlu0 %445
      %v447 = vmul.f32 %v408, 0.0078125
      %v448 = vmul.f32 %v410, 0.0078125
      %v449 = vmul.f32 %v412, 0.0078125
      %v450 = vmul.f32 %v414, 0.0078125
      %v451 = vmul.f32 %v416, 0.0078125
      %v452 = vmul.f32 %v418, 0.0078125
      %v453 = vmul.f32 %v420, 0.0078125
      %v454 = vmul.f32 %v422, 0.0078125
      %v455 = vmul.f32 %v432, 0.0078125
      %v456 = vmul.f32 %v434, 0.0078125
      %v457 = vmul.f32 %v436, 0.0078125
      %v458 = vmul.f32 %v438, 0.0078125
      %v459 = vmul.f32 %v440, 0.0078125
      %v460 = vmul.f32 %v442, 0.0078125
      %v461 = vmul.f32 %v444, 0.0078125
      %v462 = vmul.f32 %v446, 0.0078125
      %v463 = vmul.f32 %v447, %v447
      %v464 = vmul.f32 %v448, %v448
      %v465 = vmul.f32 %v449, %v449
      %v466 = vmul.f32 %v450, %v450
      %v467 = vmul.f32 %v451, %v451
      %v468 = vmul.f32 %v452, %v452
      %v469 = vmul.f32 %v453, %v453
      %v470 = vmul.f32 %v454, %v454
      %v471 = vsub.f32 %v455, %v463
      %v472 = vsub.f32 %v456, %v464
      %v473 = vsub.f32 %v457, %v465
      %v474 = vsub.f32 %v458, %v466
      %v475 = vsub.f32 %v459, %v467
      %v476 = vsub.f32 %v460, %v468
      %v477 = vsub.f32 %v461, %v469
      %v478 = vsub.f32 %v462, %v470
      %v479 = vmax.f32 %v471, 0.0
      %v480 = vmax.f32 %v472, 0.0
      %v481 = vmax.f32 %v473, 0.0
      %v482 = vmax.f32 %v474, 0.0
      %v483 = vmax.f32 %v475, 0.0
      %v484 = vmax.f32 %v476, 0.0
      %v485 = vmax.f32 %v477, 0.0
      %v486 = vmax.f32 %v478, 0.0
      %v487 = vsub.f32 %v369, %v447
      %v488 = vsub.f32 %v373, %v448
      %v489 = vsub.f32 %v379, %v449
      %v490 = vsub.f32 %v383, %v450
      %v491 = vsub.f32 %v389, %v451
      %v492 = vsub.f32 %v393, %v452
      %v493 = vsub.f32 %v399, %v453
      %v494 = vsub.f32 %v403, %v454
      %v495 = vadd.f32 %v479, 1e-05
      %v496 = vadd.f32 %v480, 1e-05
      %v497 = vadd.f32 %v481, 1e-05
      %v498 = vadd.f32 %v482, 1e-05
      %v499 = vadd.f32 %v483, 1e-05
      %v500 = vadd.f32 %v484, 1e-05
      %v501 = vadd.f32 %v485, 1e-05
      %v502 = vadd.f32 %v486, 1e-05
      %v503 = vrsqrt.pop %v495
      %v504 = vrsqrt.pop %v496
      %v505 = vrsqrt.pop %v497
      %v506 = vrsqrt.pop %v498
      %v507 = vrsqrt.pop %v499
      %v508 = vrsqrt.pop %v500
      %v509 = vrsqrt.pop %v501
      %v510 = vrsqrt.pop %v502
      %v511 = vmul.f32 %v487, %v503
      %v512 = vmul.f32 %v488, %v504
      %v513 = vmul.f32 %v489, %v505
      %v514 = vmul.f32 %v490, %v506
      %v515 = vmul.f32 %v491, %v507
      %v516 = vmul.f32 %v492, %v508
      %v517 = vmul.f32 %v493, %v509
      %v518 = vmul.f32 %v494, %v510
      %v520 = vlaneseq
      %v521 = vshrl.u32 %v520, 7
      %v522 = vsub.s32 0, %v521
      %v523 = vrot.slane %v212, %v522
      %v525 = vmul.f32 %v511, %v523
      %v526 = vmul.f32 %v512, %v523
      %v527 = vmul.f32 %v513, %v523
      %v528 = vmul.f32 %v514, %v523
      %v529 = vmul.f32 %v515, %v523
      %v530 = vmul.f32 %v516, %v523
      %v531 = vmul.f32 %v517, %v523
      %v532 = vmul.f32 %v518, %v523
      %v534 = vlaneseq
      %v535 = vshrl.u32 %v534, 7
      %v536 = vsub.s32 0, %v535
      %v537 = vrot.slane %v213, %v536
      %v539 = vadd.f32 %v525, %v537
      %v540 = vadd.f32 %v526, %v537
      %v541 = vadd.f32 %v527, %v537
      %v542 = vadd.f32 %v528, %v537
      %v543 = vadd.f32 %v529, %v537
      %v544 = vadd.f32 %v530, %v537
      %v545 = vadd.f32 %v531, %v537
      %v546 = vadd.f32 %v532, %v537
      %547 = vadd.xlane.f32.xlu0 %v371
      %v548 = vpop.xlane.xlu0 %547
      %549 = vadd.xlane.f32.xlu0 %v375
      %v550 = vpop.xlane.xlu0 %549
      %551 = vadd.xlane.f32.xlu0 %v381
      %v552 = vpop.xlane.xlu0 %551
      %553 = vadd.xlane.f32.xlu0 %v385
      %v554 = vpop.xlane.xlu0 %553
      %555 = vadd.xlane.f32.xlu0 %v391
      %v556 = vpop.xlane.xlu0 %555
      %557 = vadd.xlane.f32.xlu0 %v395
      %v558 = vpop.xlane.xlu0 %557
      %559 = vadd.xlane.f32.xlu0 %v401
      %v560 = vpop.xlane.xlu0 %559
      %561 = vadd.xlane.f32.xlu0 %v405
      %v562 = vpop.xlane.xlu0 %561
      %v563 = vmul.f32 %v371, %v371
      %v564 = vmul.f32 %v375, %v375
      %v565 = vmul.f32 %v381, %v381
      %v566 = vmul.f32 %v385, %v385
      %v567 = vmul.f32 %v391, %v391
      %v568 = vmul.f32 %v395, %v395
      %v569 = vmul.f32 %v401, %v401
      %v570 = vmul.f32 %v405, %v405
      %571 = vadd.xlane.f32.xlu0 %v563
      %v572 = vpop.xlane.xlu0 %571
      %573 = vadd.xlane.f32.xlu0 %v564
      %v574 = vpop.xlane.xlu0 %573
      %575 = vadd.xlane.f32.xlu0 %v565
      %v576 = vpop.xlane.xlu0 %575
      %577 = vadd.xlane.f32.xlu0 %v566
      %v578 = vpop.xlane.xlu0 %577
      %579 = vadd.xlane.f32.xlu0 %v567
      %v580 = vpop.xlane.xlu0 %579
      %581 = vadd.xlane.f32.xlu0 %v568
      %v582 = vpop.xlane.xlu0 %581
      %583 = vadd.xlane.f32.xlu0 %v569
      %v584 = vpop.xlane.xlu0 %583
      %585 = vadd.xlane.f32.xlu0 %v570
      %v586 = vpop.xlane.xlu0 %585
      %v587 = vmul.f32 %v548, 0.0078125
      %v588 = vmul.f32 %v550, 0.0078125
      %v589 = vmul.f32 %v552, 0.0078125
      %v590 = vmul.f32 %v554, 0.0078125
      %v591 = vmul.f32 %v556, 0.0078125
      %v592 = vmul.f32 %v558, 0.0078125
      %v593 = vmul.f32 %v560, 0.0078125
      %v594 = vmul.f32 %v562, 0.0078125
      %v595 = vmul.f32 %v572, 0.0078125
      %v596 = vmul.f32 %v574, 0.0078125
      %v597 = vmul.f32 %v576, 0.0078125
      %v598 = vmul.f32 %v578, 0.0078125
      %v599 = vmul.f32 %v580, 0.0078125
      %v600 = vmul.f32 %v582, 0.0078125
      %v601 = vmul.f32 %v584, 0.0078125
      %v602 = vmul.f32 %v586, 0.0078125
      %v603 = vmul.f32 %v587, %v587
      %v604 = vmul.f32 %v588, %v588
      %v605 = vmul.f32 %v589, %v589
      %v606 = vmul.f32 %v590, %v590
      %v607 = vmul.f32 %v591, %v591
      %v608 = vmul.f32 %v592, %v592
      %v609 = vmul.f32 %v593, %v593
      %v610 = vmul.f32 %v594, %v594
      %v611 = vsub.f32 %v595, %v603
      %v612 = vsub.f32 %v596, %v604
      %v613 = vsub.f32 %v597, %v605
      %v614 = vsub.f32 %v598, %v606
      %v615 = vsub.f32 %v599, %v607
      %v616 = vsub.f32 %v600, %v608
      %v617 = vsub.f32 %v601, %v609
      %v618 = vsub.f32 %v602, %v610
      %v619 = vmax.f32 %v611, 0.0
      %v620 = vmax.f32 %v612, 0.0
      %v621 = vmax.f32 %v613, 0.0
      %v622 = vmax.f32 %v614, 0.0
      %v623 = vmax.f32 %v615, 0.0
      %v624 = vmax.f32 %v616, 0.0
      %v625 = vmax.f32 %v617, 0.0
      %v626 = vmax.f32 %v618, 0.0
      %v627 = vsub.f32 %v371, %v587
      %v628 = vsub.f32 %v375, %v588
      %v629 = vsub.f32 %v381, %v589
      %v630 = vsub.f32 %v385, %v590
      %v631 = vsub.f32 %v391, %v591
      %v632 = vsub.f32 %v395, %v592
      %v633 = vsub.f32 %v401, %v593
      %v634 = vsub.f32 %v405, %v594
      %v635 = vadd.f32 %v619, 1e-05
      %v636 = vadd.f32 %v620, 1e-05
      %v637 = vadd.f32 %v621, 1e-05
      %v638 = vadd.f32 %v622, 1e-05
      %v639 = vadd.f32 %v623, 1e-05
      %v640 = vadd.f32 %v624, 1e-05
      %v641 = vadd.f32 %v625, 1e-05
      %v642 = vadd.f32 %v626, 1e-05
      %v643 = vrsqrt.pop %v635
      %v644 = vrsqrt.pop %v636
      %v645 = vrsqrt.pop %v637
      %v646 = vrsqrt.pop %v638
      %v647 = vrsqrt.pop %v639
      %v648 = vrsqrt.pop %v640
      %v649 = vrsqrt.pop %v641
      %v650 = vrsqrt.pop %v642
      %v651 = vmul.f32 %v627, %v643
      %v652 = vmul.f32 %v628, %v644
      %v653 = vmul.f32 %v629, %v645
      %v654 = vmul.f32 %v630, %v646
      %v655 = vmul.f32 %v631, %v647
      %v656 = vmul.f32 %v632, %v648
      %v657 = vmul.f32 %v633, %v649
      %v658 = vmul.f32 %v634, %v650
      %v659 = vmul.f32 %v651, %v523
      %v660 = vmul.f32 %v652, %v523
      %v661 = vmul.f32 %v653, %v523
      %v662 = vmul.f32 %v654, %v523
      %v663 = vmul.f32 %v655, %v523
      %v664 = vmul.f32 %v656, %v523
      %v665 = vmul.f32 %v657, %v523
      %v666 = vmul.f32 %v658, %v523
      %v667 = vadd.f32 %v659, %v537
      %v668 = vadd.f32 %v660, %v537
      %v669 = vadd.f32 %v661, %v537
      %v670 = vadd.f32 %v662, %v537
      %v671 = vadd.f32 %v663, %v537
      %v672 = vadd.f32 %v664, %v537
      %v673 = vadd.f32 %v665, %v537
      %v674 = vadd.f32 %v666, %v537
      %675 = vst [vmem:[%s201] sm:$0xff] %v539
      %676 = vst [vmem:[%s201 + $0x8] sm:$0xff] %v667
      %677 = vst [vmem:[%s201 + $0x20] sm:$0xff] %v540
      %678 = vst [vmem:[%s201 + $0x28] sm:$0xff] %v668
      %679 = vst [vmem:[%s201 + $0x40] sm:$0xff] %v541
      %680 = vst [vmem:[%s201 + $0x48] sm:$0xff] %v669
      %681 = vst [vmem:[%s201 + $0x60] sm:$0xff] %v542
      %682 = vst [vmem:[%s201 + $0x68] sm:$0xff] %v670
      %683 = vst [vmem:[%s201 + $0x80] sm:$0xff] %v543
      %684 = vst [vmem:[%s201 + $0x88] sm:$0xff] %v671
      %685 = vst [vmem:[%s201 + $0xa0] sm:$0xff] %v544
      %686 = vst [vmem:[%s201 + $0xa8] sm:$0xff] %v672
      %687 = vst [vmem:[%s201 + $0xc0] sm:$0xff] %v545
      %688 = vst [vmem:[%s201 + $0xc8] sm:$0xff] %v673
      %689 = vst [vmem:[%s201 + $0xe0] sm:$0xff] %v546
      %690 = vst [vmem:[%s201 + $0xe8] sm:$0xff] %v674
      %v691 = vld [vmem:[%s1 + $0x8] sm:$0xff]
      %v692 = vld [vmem:[%s1 + $0x18] sm:$0xff]
      %v693 = vld [vmem:[%s1 + $0x28] sm:$0xff]
      %v694 = vld [vmem:[%s1 + $0x38] sm:$0xff]
      %v695 = vld [vmem:[%s1 + $0x48] sm:$0xff]
      %v696 = vld [vmem:[%s1 + $0x58] sm:$0xff]
      %v697 = vld [vmem:[%s1 + $0x68] sm:$0xff]
      %v698 = vld [vmem:[%s1 + $0x78] sm:$0xff]
      %v699 = vld [vmem:[%s1 + $0x88] sm:$0xff]
      %v700 = vld [vmem:[%s1 + $0x98] sm:$0xff]
      %v701 = vld [vmem:[%s1 + $0xa8] sm:$0xff]
      %v702 = vld [vmem:[%s1 + $0xb8] sm:$0xff]
      %v703 = vld [vmem:[%s1 + $0xc8] sm:$0xff]
      %v704 = vld [vmem:[%s1 + $0xd8] sm:$0xff]
      %v705 = vld [vmem:[%s1 + $0xe8] sm:$0xff]
      %v706 = vld [vmem:[%s1 + $0xf8] sm:$0xff]
      %v723 = vunpack.c.l.b16 %v691
      %v724 = vunpack.c.h.b16 %v691
      %v725 = vunpack.c.l.b16 %v692
      %v726 = vunpack.c.h.b16 %v692
      %v727 = vunpack.c.l.b16 %v693
      %v728 = vunpack.c.h.b16 %v693
      %v729 = vunpack.c.l.b16 %v694
      %v730 = vunpack.c.h.b16 %v694
      %v731 = vunpack.c.l.b16 %v695
      %v732 = vunpack.c.h.b16 %v695
      %v733 = vunpack.c.l.b16 %v696
      %v734 = vunpack.c.h.b16 %v696
      %v735 = vunpack.c.l.b16 %v697
      %v736 = vunpack.c.h.b16 %v697
      %v737 = vunpack.c.l.b16 %v698
      %v738 = vunpack.c.h.b16 %v698
      %v739 = vunpack.c.l.b16 %v699
      %v740 = vunpack.c.h.b16 %v699
      %v741 = vunpack.c.l.b16 %v700
      %v742 = vunpack.c.h.b16 %v700
      %v743 = vunpack.c.l.b16 %v701
      %v744 = vunpack.c.h.b16 %v701
      %v745 = vunpack.c.l.b16 %v702
      %v746 = vunpack.c.h.b16 %v702
      %v747 = vunpack.c.l.b16 %v703
      %v748 = vunpack.c.h.b16 %v703
      %v749 = vunpack.c.l.b16 %v704
      %v750 = vunpack.c.h.b16 %v704
      %v751 = vunpack.c.l.b16 %v705
      %v752 = vunpack.c.h.b16 %v705
      %v753 = vunpack.c.l.b16 %v706
      %v754 = vunpack.c.h.b16 %v706
      %v755 = vpack.c.b16 %v725, %v723
      %v756 = vpack.c.b16 %v726, %v724
      %v757 = vpack.c.b16 %v729, %v727
      %v758 = vpack.c.b16 %v730, %v728
      %v759 = vpack.c.b16 %v733, %v731
      %v760 = vpack.c.b16 %v734, %v732
      %v761 = vpack.c.b16 %v737, %v735
      %v762 = vpack.c.b16 %v738, %v736
      %v763 = vpack.c.b16 %v741, %v739
      %v764 = vpack.c.b16 %v742, %v740
      %v765 = vpack.c.b16 %v745, %v743
      %v766 = vpack.c.b16 %v746, %v744
      %v767 = vpack.c.b16 %v749, %v747
      %v768 = vpack.c.b16 %v750, %v748
      %v769 = vpack.c.b16 %v753, %v751
      %v770 = vpack.c.b16 %v754, %v752
      %787 = vmatprep.subr.bf16.mxu0 %v770
      %788 = vmatpush1.bf16.msra.mxu0 %v769
      %789 = vmatprep.subr.bf16.mxu0 %v768
      %790 = vmatpush1.bf16.msra.mxu0 %v767
      %791 = vmatprep.subr.bf16.mxu0 %v766
      %792 = vmatpush1.bf16.msra.mxu0 %v765
      %793 = vmatprep.subr.bf16.mxu0 %v764
      %794 = vmatpush1.bf16.msra.mxu0 %v763
      %795 = vmatprep.subr.bf16.mxu0 %v762
      %796 = vmatpush1.bf16.msra.mxu0 %v761
      %797 = vmatprep.subr.bf16.mxu0 %v760
      %798 = vmatpush1.bf16.msra.mxu0 %v759
      %799 = vmatprep.subr.bf16.mxu0 %v758
      %800 = vmatpush1.bf16.msra.mxu0 %v757
      %801 = vmatprep.subr.bf16.mxu0 %v756
      %802 = vmatpush1.bf16.msra.mxu0 %v755
      %803 = vmatprep.subr.bf16.mxu0 0
      %804 = vmatpush2.bf16.msra.mxu0 0
      %805 = vmatprep.subr.bf16.mxu0 0
      %806 = vmatpush2.bf16.msra.mxu0 0
      %807 = vmatprep.subr.bf16.mxu0 0
      %808 = vmatpush2.bf16.msra.mxu0 0
      %809 = vmatprep.subr.bf16.mxu0 0
      %810 = vmatpush2.bf16.msra.mxu0 0
      %811 = vmatprep.subr.bf16.mxu0 0
      %812 = vmatpush2.bf16.msra.mxu0 0
      %813 = vmatprep.subr.bf16.mxu0 0
      %814 = vmatpush2.bf16.msra.mxu0 0
      %815 = vmatprep.subr.bf16.mxu0 0
      %816 = vmatpush2.bf16.msra.mxu0 0
      %817 = vmatprep.subr.bf16.mxu0 0
      %818 = vmatpush2.bf16.msra.mxu0 0
      %819 = vmatprep.mubr.bf16.mxu0 0
      %820 = vmatmul.mubr.bf16.gmra.mxu0 %v246
      %v821 = vpop.f32.mrf.mxu0
      %v822 = vadd.f32 0.0, %v821
      %v823 = vpop.f32.mrf.mxu0
      %v824 = vadd.f32 0.0, %v823
      %v825 = vpop.f32.mrf.mxu0
      %v826 = vadd.f32 0.0, %v825
      %v827 = vpop.f32.mrf.mxu0
      %v828 = vadd.f32 0.0, %v827
      %829 = vmatprep.mubr.bf16.mxu0 0
      %830 = vmatmul.mubr.bf16.gmra.mxu0 %v247
      %v831 = vpop.f32.mrf.mxu0
      %v832 = vadd.f32 0.0, %v831
      %v833 = vpop.f32.mrf.mxu0
      %v834 = vadd.f32 0.0, %v833
      %v835 = vpop.f32.mrf.mxu0
      %v836 = vadd.f32 0.0, %v835
      %v837 = vpop.f32.mrf.mxu0
      %v838 = vadd.f32 0.0, %v837
      %839 = vmatprep.mubr.bf16.mxu0 0
      %840 = vmatmul.mubr.bf16.gmra.mxu0 %v248
      %v841 = vpop.f32.mrf.mxu0
      %v842 = vadd.f32 0.0, %v841
      %v843 = vpop.f32.mrf.mxu0
      %v844 = vadd.f32 0.0, %v843
      %v845 = vpop.f32.mrf.mxu0
      %v846 = vadd.f32 0.0, %v845
      %v847 = vpop.f32.mrf.mxu0
      %v848 = vadd.f32 0.0, %v847
      %849 = vmatprep.mubr.bf16.mxu0 0
      %850 = vmatmul.mubr.bf16.gmra.mxu0 %v249
      %v851 = vpop.f32.mrf.mxu0
      %v852 = vadd.f32 0.0, %v851
      %v853 = vpop.f32.mrf.mxu0
      %v854 = vadd.f32 0.0, %v853
      %v855 = vpop.f32.mrf.mxu0
      %v856 = vadd.f32 0.0, %v855
      %v857 = vpop.f32.mrf.mxu0
      %v858 = vadd.f32 0.0, %v857
      %859 = vdwg.mxu0
      %860 = vadd.xlane.f32.xlu0 %v822
      %v861 = vpop.xlane.xlu0 %860
      %862 = vadd.xlane.f32.xlu0 %v826
      %v863 = vpop.xlane.xlu0 %862
      %864 = vadd.xlane.f32.xlu0 %v832
      %v865 = vpop.xlane.xlu0 %864
      %866 = vadd.xlane.f32.xlu0 %v836
      %v867 = vpop.xlane.xlu0 %866
      %868 = vadd.xlane.f32.xlu0 %v842
      %v869 = vpop.xlane.xlu0 %868
      %870 = vadd.xlane.f32.xlu0 %v846
      %v871 = vpop.xlane.xlu0 %870
      %872 = vadd.xlane.f32.xlu0 %v852
      %v873 = vpop.xlane.xlu0 %872
      %874 = vadd.xlane.f32.xlu0 %v856
      %v875 = vpop.xlane.xlu0 %874
      %v876 = vmul.f32 %v822, %v822
      %v877 = vmul.f32 %v826, %v826
      %v878 = vmul.f32 %v832, %v832
      %v879 = vmul.f32 %v836, %v836
      %v880 = vmul.f32 %v842, %v842
      %v881 = vmul.f32 %v846, %v846
      %v882 = vmul.f32 %v852, %v852
      %v883 = vmul.f32 %v856, %v856
      %884 = vadd.xlane.f32.xlu0 %v876
      %v885 = vpop.xlane.xlu0 %884
      %886 = vadd.xlane.f32.xlu0 %v877
      %v887 = vpop.xlane.xlu0 %886
      %888 = vadd.xlane.f32.xlu0 %v878
      %v889 = vpop.xlane.xlu0 %888
      %890 = vadd.xlane.f32.xlu0 %v879
      %v891 = vpop.xlane.xlu0 %890
      %892 = vadd.xlane.f32.xlu0 %v880
      %v893 = vpop.xlane.xlu0 %892
      %894 = vadd.xlane.f32.xlu0 %v881
      %v895 = vpop.xlane.xlu0 %894
      %896 = vadd.xlane.f32.xlu0 %v882
      %v897 = vpop.xlane.xlu0 %896
      %898 = vadd.xlane.f32.xlu0 %v883
      %v899 = vpop.xlane.xlu0 %898
      %v900 = vmul.f32 %v861, 0.0078125
      %v901 = vmul.f32 %v863, 0.0078125
      %v902 = vmul.f32 %v865, 0.0078125
      %v903 = vmul.f32 %v867, 0.0078125
      %v904 = vmul.f32 %v869, 0.0078125
      %v905 = vmul.f32 %v871, 0.0078125
      %v906 = vmul.f32 %v873, 0.0078125
      %v907 = vmul.f32 %v875, 0.0078125
      %v908 = vmul.f32 %v885, 0.0078125
      %v909 = vmul.f32 %v887, 0.0078125
      %v910 = vmul.f32 %v889, 0.0078125
      %v911 = vmul.f32 %v891, 0.0078125
      %v912 = vmul.f32 %v893, 0.0078125
      %v913 = vmul.f32 %v895, 0.0078125
      %v914 = vmul.f32 %v897, 0.0078125
      %v915 = vmul.f32 %v899, 0.0078125
      %v916 = vmul.f32 %v900, %v900
      %v917 = vmul.f32 %v901, %v901
      %v918 = vmul.f32 %v902, %v902
      %v919 = vmul.f32 %v903, %v903
      %v920 = vmul.f32 %v904, %v904
      %v921 = vmul.f32 %v905, %v905
      %v922 = vmul.f32 %v906, %v906
      %v923 = vmul.f32 %v907, %v907
      %v924 = vsub.f32 %v908, %v916
      %v925 = vsub.f32 %v909, %v917
      %v926 = vsub.f32 %v910, %v918
      %v927 = vsub.f32 %v911, %v919
      %v928 = vsub.f32 %v912, %v920
      %v929 = vsub.f32 %v913, %v921
      %v930 = vsub.f32 %v914, %v922
      %v931 = vsub.f32 %v915, %v923
      %v932 = vmax.f32 %v924, 0.0
      %v933 = vmax.f32 %v925, 0.0
      %v934 = vmax.f32 %v926, 0.0
      %v935 = vmax.f32 %v927, 0.0
      %v936 = vmax.f32 %v928, 0.0
      %v937 = vmax.f32 %v929, 0.0
      %v938 = vmax.f32 %v930, 0.0
      %v939 = vmax.f32 %v931, 0.0
      %v940 = vsub.f32 %v822, %v900
      %v941 = vsub.f32 %v826, %v901
      %v942 = vsub.f32 %v832, %v902
      %v943 = vsub.f32 %v836, %v903
      %v944 = vsub.f32 %v842, %v904
      %v945 = vsub.f32 %v846, %v905
      %v946 = vsub.f32 %v852, %v906
      %v947 = vsub.f32 %v856, %v907
      %v948 = vadd.f32 %v932, 1e-05
      %v949 = vadd.f32 %v933, 1e-05
      %v950 = vadd.f32 %v934, 1e-05
      %v951 = vadd.f32 %v935, 1e-05
      %v952 = vadd.f32 %v936, 1e-05
      %v953 = vadd.f32 %v937, 1e-05
      %v954 = vadd.f32 %v938, 1e-05
      %v955 = vadd.f32 %v939, 1e-05
      %v956 = vrsqrt.pop %v948
      %v957 = vrsqrt.pop %v949
      %v958 = vrsqrt.pop %v950
      %v959 = vrsqrt.pop %v951
      %v960 = vrsqrt.pop %v952
      %v961 = vrsqrt.pop %v953
      %v962 = vrsqrt.pop %v954
      %v963 = vrsqrt.pop %v955
      %v964 = vmul.f32 %v940, %v956
      %v965 = vmul.f32 %v941, %v957
      %v966 = vmul.f32 %v942, %v958
      %v967 = vmul.f32 %v943, %v959
      %v968 = vmul.f32 %v944, %v960
      %v969 = vmul.f32 %v945, %v961
      %v970 = vmul.f32 %v946, %v962
      %v971 = vmul.f32 %v947, %v963
      %v972 = vmul.f32 %v964, %v523
      %v973 = vmul.f32 %v965, %v523
      %v974 = vmul.f32 %v966, %v523
      %v975 = vmul.f32 %v967, %v523
      %v976 = vmul.f32 %v968, %v523
      %v977 = vmul.f32 %v969, %v523
      %v978 = vmul.f32 %v970, %v523
      %v979 = vmul.f32 %v971, %v523
      %v980 = vadd.f32 %v972, %v537
      %v981 = vadd.f32 %v973, %v537
      %v982 = vadd.f32 %v974, %v537
      %v983 = vadd.f32 %v975, %v537
      %v984 = vadd.f32 %v976, %v537
      %v985 = vadd.f32 %v977, %v537
      %v986 = vadd.f32 %v978, %v537
      %v987 = vadd.f32 %v979, %v537
      %988 = vadd.xlane.f32.xlu0 %v824
      %v989 = vpop.xlane.xlu0 %988
      %990 = vadd.xlane.f32.xlu0 %v828
      %v991 = vpop.xlane.xlu0 %990
      %992 = vadd.xlane.f32.xlu0 %v834
      %v993 = vpop.xlane.xlu0 %992
      %994 = vadd.xlane.f32.xlu0 %v838
      %v995 = vpop.xlane.xlu0 %994
      %996 = vadd.xlane.f32.xlu0 %v844
      %v997 = vpop.xlane.xlu0 %996
      %998 = vadd.xlane.f32.xlu0 %v848
      %v999 = vpop.xlane.xlu0 %998
      %1000 = vadd.xlane.f32.xlu0 %v854
      %v1001 = vpop.xlane.xlu0 %1000
      %1002 = vadd.xlane.f32.xlu0 %v858
      %v1003 = vpop.xlane.xlu0 %1002
      %v1004 = vmul.f32 %v824, %v824
      %v1005 = vmul.f32 %v828, %v828
      %v1006 = vmul.f32 %v834, %v834
      %v1007 = vmul.f32 %v838, %v838
      %v1008 = vmul.f32 %v844, %v844
      %v1009 = vmul.f32 %v848, %v848
      %v1010 = vmul.f32 %v854, %v854
      %v1011 = vmul.f32 %v858, %v858
      %1012 = vadd.xlane.f32.xlu0 %v1004
      %v1013 = vpop.xlane.xlu0 %1012
      %1014 = vadd.xlane.f32.xlu0 %v1005
      %v1015 = vpop.xlane.xlu0 %1014
      %1016 = vadd.xlane.f32.xlu0 %v1006
      %v1017 = vpop.xlane.xlu0 %1016
      %1018 = vadd.xlane.f32.xlu0 %v1007
      %v1019 = vpop.xlane.xlu0 %1018
      %1020 = vadd.xlane.f32.xlu0 %v1008
      %v1021 = vpop.xlane.xlu0 %1020
      %1022 = vadd.xlane.f32.xlu0 %v1009
      %v1023 = vpop.xlane.xlu0 %1022
      %1024 = vadd.xlane.f32.xlu0 %v1010
      %v1025 = vpop.xlane.xlu0 %1024
      %1026 = vadd.xlane.f32.xlu0 %v1011
      %v1027 = vpop.xlane.xlu0 %1026
      %v1028 = vmul.f32 %v989, 0.0078125
      %v1029 = vmul.f32 %v991, 0.0078125
      %v1030 = vmul.f32 %v993, 0.0078125
      %v1031 = vmul.f32 %v995, 0.0078125
      %v1032 = vmul.f32 %v997, 0.0078125
      %v1033 = vmul.f32 %v999, 0.0078125
      %v1034 = vmul.f32 %v1001, 0.0078125
      %v1035 = vmul.f32 %v1003, 0.0078125
      %v1036 = vmul.f32 %v1013, 0.0078125
      %v1037 = vmul.f32 %v1015, 0.0078125
      %v1038 = vmul.f32 %v1017, 0.0078125
      %v1039 = vmul.f32 %v1019, 0.0078125
      %v1040 = vmul.f32 %v1021, 0.0078125
      %v1041 = vmul.f32 %v1023, 0.0078125
      %v1042 = vmul.f32 %v1025, 0.0078125
      %v1043 = vmul.f32 %v1027, 0.0078125
      %v1044 = vmul.f32 %v1028, %v1028
      %v1045 = vmul.f32 %v1029, %v1029
      %v1046 = vmul.f32 %v1030, %v1030
      %v1047 = vmul.f32 %v1031, %v1031
      %v1048 = vmul.f32 %v1032, %v1032
      %v1049 = vmul.f32 %v1033, %v1033
      %v1050 = vmul.f32 %v1034, %v1034
      %v1051 = vmul.f32 %v1035, %v1035
      %v1052 = vsub.f32 %v1036, %v1044
      %v1053 = vsub.f32 %v1037, %v1045
      %v1054 = vsub.f32 %v1038, %v1046
      %v1055 = vsub.f32 %v1039, %v1047
      %v1056 = vsub.f32 %v1040, %v1048
      %v1057 = vsub.f32 %v1041, %v1049
      %v1058 = vsub.f32 %v1042, %v1050
      %v1059 = vsub.f32 %v1043, %v1051
      %v1060 = vmax.f32 %v1052, 0.0
      %v1061 = vmax.f32 %v1053, 0.0
      %v1062 = vmax.f32 %v1054, 0.0
      %v1063 = vmax.f32 %v1055, 0.0
      %v1064 = vmax.f32 %v1056, 0.0
      %v1065 = vmax.f32 %v1057, 0.0
      %v1066 = vmax.f32 %v1058, 0.0
      %v1067 = vmax.f32 %v1059, 0.0
      %v1068 = vsub.f32 %v824, %v1028
      %v1069 = vsub.f32 %v828, %v1029
      %v1070 = vsub.f32 %v834, %v1030
      %v1071 = vsub.f32 %v838, %v1031
      %v1072 = vsub.f32 %v844, %v1032
      %v1073 = vsub.f32 %v848, %v1033
      %v1074 = vsub.f32 %v854, %v1034
      %v1075 = vsub.f32 %v858, %v1035
      %v1076 = vadd.f32 %v1060, 1e-05
      %v1077 = vadd.f32 %v1061, 1e-05
      %v1078 = vadd.f32 %v1062, 1e-05
      %v1079 = vadd.f32 %v1063, 1e-05
      %v1080 = vadd.f32 %v1064, 1e-05
      %v1081 = vadd.f32 %v1065, 1e-05
      %v1082 = vadd.f32 %v1066, 1e-05
      %v1083 = vadd.f32 %v1067, 1e-05
      %v1084 = vrsqrt.pop %v1076
      %v1085 = vrsqrt.pop %v1077
      %v1086 = vrsqrt.pop %v1078
      %v1087 = vrsqrt.pop %v1079
      %v1088 = vrsqrt.pop %v1080
      %v1089 = vrsqrt.pop %v1081
      %v1090 = vrsqrt.pop %v1082
      %v1091 = vrsqrt.pop %v1083
      %v1092 = vmul.f32 %v1068, %v1084
      %v1093 = vmul.f32 %v1069, %v1085
      %v1094 = vmul.f32 %v1070, %v1086
      %v1095 = vmul.f32 %v1071, %v1087
      %v1096 = vmul.f32 %v1072, %v1088
      %v1097 = vmul.f32 %v1073, %v1089
      %v1098 = vmul.f32 %v1074, %v1090
      %v1099 = vmul.f32 %v1075, %v1091
      %v1100 = vmul.f32 %v1092, %v523
      %v1101 = vmul.f32 %v1093, %v523
      %v1102 = vmul.f32 %v1094, %v523
      %v1103 = vmul.f32 %v1095, %v523
      %v1104 = vmul.f32 %v1096, %v523
      %v1105 = vmul.f32 %v1097, %v523
      %v1106 = vmul.f32 %v1098, %v523
      %v1107 = vmul.f32 %v1099, %v523
      %v1108 = vadd.f32 %v1100, %v537
      %v1109 = vadd.f32 %v1101, %v537
      %v1110 = vadd.f32 %v1102, %v537
      %v1111 = vadd.f32 %v1103, %v537
      %v1112 = vadd.f32 %v1104, %v537
      %v1113 = vadd.f32 %v1105, %v537
      %v1114 = vadd.f32 %v1106, %v537
      %v1115 = vadd.f32 %v1107, %v537
      %s1116 = scalar_lea.vmem %s201, 16
      %1117 = vst [vmem:[%s1116] sm:$0xff] %v980
      %1118 = vst [vmem:[%s1116 + $0x8] sm:$0xff] %v1108
      %1119 = vst [vmem:[%s1116 + $0x20] sm:$0xff] %v981
      %1120 = vst [vmem:[%s1116 + $0x28] sm:$0xff] %v1109
      %1121 = vst [vmem:[%s1116 + $0x40] sm:$0xff] %v982
      %1122 = vst [vmem:[%s1116 + $0x48] sm:$0xff] %v1110
      %1123 = vst [vmem:[%s1116 + $0x60] sm:$0xff] %v983
      %1124 = vst [vmem:[%s1116 + $0x68] sm:$0xff] %v1111
      %1125 = vst [vmem:[%s1116 + $0x80] sm:$0xff] %v984
      %1126 = vst [vmem:[%s1116 + $0x88] sm:$0xff] %v1112
      %1127 = vst [vmem:[%s1116 + $0xa0] sm:$0xff] %v985
      %1128 = vst [vmem:[%s1116 + $0xa8] sm:$0xff] %v1113
      %1129 = vst [vmem:[%s1116 + $0xc0] sm:$0xff] %v986
      %1130 = vst [vmem:[%s1116 + $0xc8] sm:$0xff] %v1114
      %1131 = vst [vmem:[%s1116 + $0xe0] sm:$0xff] %v987
      %1132 = vst [vmem:[%s1116 + $0xe8] sm:$0xff] %v1115
      %s1133 = smul.u32 8, %s15
      %p1134 = scmp.lt.s32.totalorder %s1133, 15
      %s1135 = scalar_select %p1134, %s1133, 15
      %s1136 = smul.addr %s1135, 4
      %s1137 = smul.addr %s1136, 8
      %s1138 = scalar_lea.vmem %s4, %s1137
      // Predicated region
      $region37: #{patch_expand.1} parent=35 // pred_check
        %p1139 = pneg %p122
      $region38: #{patch_expand.1} parent=35 // pred_check_branch
        %1141 = sbr.rel (%p1139) target = $region40
      $region39: #{patch_expand.1} parent=35 // pred_region
        %s1142 = smul.u32 8, %s15
      $region40: #{patch_expand.1} parent=35 // pred_fallthru
        _
    $region36: #{patch_expand.1} parent=5 // pred_fallthru
      _
    %p1143 = scmp.le.s32.totalorder 2, %s10
    // Predicated region
    $region41: #{patch_expand.1} parent=5 // pred_check
      %p1144 = pneg %p1143
    $region42: #{patch_expand.1} parent=5 // pred_check_branch
      %1146 = sbr.rel (%p1144) target = $region44
    $region43: #{patch_expand.1} parent=5 // pred_region
      %s1147 = ssub.s32 %s10, 2
      // Predicated region
      $region45: #{patch_expand.1} parent=43 // pred_check
        %p1148 = pneg %p128
      $region46: #{patch_expand.1} parent=43 // pred_check_branch
        %1150 = sbr.rel (%p1148) target = $region48
      $region47: #{patch_expand.1} parent=43 // pred_region
        %s1151 = smul.u32 8, %s16
        %p1152 = scmp.lt.s32.totalorder %s1151, 15
        %s1153 = scalar_select %p1152, %s1151, 15
        %s1154 = smul.addr %s1153, 4
        %s1155 = smul.addr %s1154, 8
        %s1156 = scalar_lea.vmem %s4, %s1155
      $region48: #{patch_expand.1} parent=43 // pred_fallthru
        _
    $region44: #{patch_expand.1} parent=5 // pred_fallthru
      _
  $region6: #{patch_expand.1} parent=0 // loop_footer
    %s14 = sadd.s32 1, %s10
  $region7: #{patch_expand.1} parent=0 // loop_footer_branch
    %9 = sbr.rel target = $region3
  $region8: #{patch_expand.1} parent=0 // loop_exit
    _

</llo_original>
